<compile_context>
chip_gen: v6e
topology: v6e:2x2x1
jax: 0.10.0
libtpu: 0.0.40
codegen_flags: <defaults>
</compile_context>

<pallas_src>
import jax
import jax.numpy as jnp
from jax.experimental import pallas as pl
from jax.experimental.pallas import tpu as pltpu

LANE = 128


def _round_up(n, m):
    return ((n + m - 1) // m) * m


def _mlp_kernel(x_ref, w1_ref, b1_ref, w2_ref, b2_ref, w3_ref, b3_ref, o_ref):
    """Fused 3-layer MLP.  bf16 MXU operands, f32 accumulation (preferred_element_type);
    bias adds / ReLU stay in f32 (v5e VPU has no bf16 ALU)."""
    x = x_ref[...].astype(jnp.bfloat16)                        # in-kernel cast, hidden under MXU
    h = jnp.dot(x, w1_ref[...], preferred_element_type=jnp.float32)
    h = jnp.maximum(h + b1_ref[...], 0.0)                      # F.relu(layer1(x))
    h = jnp.dot(h.astype(jnp.bfloat16), w2_ref[...], preferred_element_type=jnp.float32)
    h = jnp.maximum(h + b2_ref[...], 0.0)                      # F.relu(layer2(.))
    h = jnp.dot(h.astype(jnp.bfloat16), w3_ref[...], preferred_element_type=jnp.float32)
    o_ref[...] = h + b3_ref[...]                               # final linear, narrow f32 store


def comm_cost_net_forward(x, params, *, batch_tile=None):
    """Pallas forward for CommCostNet.

    x:       (..., num_features); leading dims flattened (matches `out.view(-1, num_outputs)`)
    params:  exactly 3 (W, b) pairs, W shape (in_dim, out_dim)  (2 hidden layers + output)
    returns: (rows, num_outputs) float32
    """
    assert len(params) == 3, "fused kernel assumes exactly 2 hidden layers + 1 output layer"
    (w1, b1), (w2, b2), (w3, b3) = params

    f_in = w1.shape[0]
    h1, h2 = w1.shape[1], w2.shape[1]
    num_outputs = w3.shape[1]
    assert x.shape[-1] == f_in

    # module semantics: out = X.float(); no-op if already f32
    x2 = x.reshape(-1, f_in).astype(jnp.float32)
    rows = x2.shape[0]

    # ---- batch tiling: big tiles amortize per-step overhead; grid handles the ragged tail.
    if batch_tile is None:
        batch_tile = min(8192, _round_up(rows, 8))
    tb = batch_tile
    assert tb % 8 == 0 and tb > 0, "batch tile must be a positive multiple of 8"
    grid = (pl.cdiv(rows, tb),)

    # ---- lane-dense padding of the *hidden* widths only (ReLU(0)=0 and zero weight rows are
    #      exactly neutral); the output layer stays at its true width num_outputs.
    h1p = _round_up(h1, LANE)
    h2p = _round_up(h2, LANE)

    w1p = jnp.zeros((f_in, h1p), jnp.bfloat16).at[:, :h1].set(w1.astype(jnp.bfloat16))
    w2p = jnp.zeros((h1p, h2p), jnp.bfloat16).at[:h1, :h2].set(w2.astype(jnp.bfloat16))
    w3p = jnp.zeros((h2p, num_outputs), jnp.bfloat16).at[:h2, :].set(w3.astype(jnp.bfloat16))
    b1p = jnp.zeros((1, h1p), jnp.float32).at[0, :h1].set(b1.astype(jnp.float32))
    b2p = jnp.zeros((1, h2p), jnp.float32).at[0, :h2].set(b2.astype(jnp.float32))
    b3p = b3.astype(jnp.float32).reshape(1, num_outputs)

    def full(arr):
        shape = arr.shape
        return pl.BlockSpec(shape, lambda i: (0,) * len(shape))  # constants: whole array each step

    # advisory cost estimate (real traffic: f32 x in, narrow f32 out, tiny weights)
    flops = 2 * rows * (f_in * h1p + h1p * h2p + h2p * num_outputs)
    w_bytes = (w1p.size + w2p.size + w3p.size) * 2
    b_bytes = (b1p.size + b2p.size + b3p.size) * 4
    bytes_accessed = rows * f_in * 4 + rows * num_outputs * 4 + w_bytes + b_bytes

    # rough VMEM footprint: double-buffered x/out tiles + live f32/bf16 activations + constants
    vmem_est = (2 * tb * f_in * 4                 # x tile (f32), double buffered
                + 2 * tb * num_outputs * 4        # out tile (f32, narrow), double buffered
                + tb * (h1p + h2p) * 4            # f32 hidden activations
                + tb * (f_in + h1p + h2p) * 2     # bf16 matmul-operand copies
                + 2 * (w_bytes + b_bytes))        # constants (default double buffering)

    compiler_kwargs = dict(dimension_semantics=("parallel",))
    if vmem_est > 12 * 1024 * 1024:
        # Raise the scoped limit for big tiles, but never past 3/4 of the chip's *physical*
        # VMEM (v7x has only 64 MiB per TensorCore; v5e/v6e have 128 MiB).
        try:
            vmem_cap = int(pltpu.get_tpu_info().vmem_capacity_bytes)
        except Exception:
            vmem_cap = 64 * 1024 * 1024  # conservative fallback: v7x per-core VMEM
        vmem_ceiling = (vmem_cap * 3) // 4
        compiler_kwargs["vmem_limit_bytes"] = int(
            min(max(2 * vmem_est, 32 * 1024 * 1024), vmem_ceiling))

    out = pl.pallas_call(
        _mlp_kernel,
        out_shape=jax.ShapeDtypeStruct((rows, num_outputs), jnp.float32),
        grid_spec=pltpu.PrefetchScalarGridSpec(
            num_scalar_prefetch=0,
            grid=grid,
            in_specs=[
                pl.BlockSpec((tb, f_in), lambda i: (i, 0)),          # x tile over batch rows
                full(w1p), full(b1p),
                full(w2p), full(b2p),
                full(w3p), full(b3p),
            ],
            out_specs=pl.BlockSpec((tb, num_outputs), lambda i: (i, 0)),  # narrow (16 B/row) store
        ),
        compiler_params=pltpu.CompilerParams(**compiler_kwargs),
        cost_estimate=pl.CostEstimate(
            flops=flops, transcendentals=0, bytes_accessed=bytes_accessed),
    )(x2, w1p, b1p, w2p, b2p, w3p, b3p)

    return out


def init_params(key, num_features, mlp_sizes, num_outputs):
    """Deterministic init mimicking nn.Linear default: U(-1/sqrt(fan_in), 1/sqrt(fan_in))."""
    sizes = [num_features] + list(mlp_sizes) + [num_outputs]
    params = []
    for k in range(len(sizes) - 1):
        fan_in, fan_out = sizes[k], sizes[k + 1]
        key, kw, kb = jax.random.split(key, 3)
        bound = 1.0 / (fan_in ** 0.5)
        # store W as (in, out); PyTorch stores (out, in) and computes x @ W.T — same math
        W = jax.random.uniform(kw, (fan_in, fan_out), jnp.float32, -bound, bound)
        b = jax.random.uniform(kb, (fan_out,), jnp.float32, -bound, bound)
        params.append((W, b))
    return params


def reference_forward_f32(x, params):
    """PyTorch-equivalent pure-f32 forward."""
    out = x.astype(jnp.float32)
    for (W, b) in params[:-1]:
        out = jnp.maximum(out @ W + b, 0.0)
    W, b = params[-1]
    out = out @ W + b
    return out.reshape(-1, params[-1][0].shape[1])


def reference_forward_matched(x, params):
    """Same precision pipeline as the kernel: bf16 matmul operands, f32 accumulation."""
    (w1, b1), (w2, b2), (w3, b3) = params
    h = jnp.dot(x.astype(jnp.float32).astype(jnp.bfloat16), w1.astype(jnp.bfloat16),
                preferred_element_type=jnp.float32) + b1
    h = jnp.maximum(h, 0.0)
    h = jnp.dot(h.astype(jnp.bfloat16), w2.astype(jnp.bfloat16),
                preferred_element_type=jnp.float32) + b2
    h = jnp.maximum(h, 0.0)
    h = jnp.dot(h.astype(jnp.bfloat16), w3.astype(jnp.bfloat16),
                preferred_element_type=jnp.float32) + b3
    return h.reshape(-1, w3.shape[1])


if __name__ == "__main__":
    key = jax.random.PRNGKey(0)

    # small shapes consistent with the module: num_features=32, two hidden layers, 4 outputs
    batch = 8
    num_features = 32
    mlp_sizes = [64, 64]
    num_outputs = 4

    key, kx = jax.random.split(key)
    x = jax.random.normal(kx, (batch, num_features), jnp.float32)

    params = init_params(key, num_features, mlp_sizes, num_outputs)

    y = comm_cost_net_forward(x, params)
    y = jax.block_until_ready(y)
    assert y.shape == (batch, num_outputs)

    # tight check against a precision-matched reference (bf16 matmuls, f32 accumulation)
    y_matched = reference_forward_matched(x, params)
    assert jnp.allclose(y, y_matched, atol=2e-3, rtol=2e-3), "mismatch vs matched-precision ref"

    # looser check against the pure-f32 PyTorch-equivalent reference (bf16 quantization noise)
    y_ref = reference_forward_f32(x, params)
    assert jnp.allclose(y, y_ref, atol=5e-2, rtol=5e-2), "mismatch vs f32 reference"

    print("KERNEL_OK")
</pallas_src>

<mosaic_0001>
module attributes {stable_mosaic.version = 11 : i64} {
  func.func @_mlp_kernel(%arg0: i32, %arg1: memref<8x32xf32, #tpu.memory_space<vmem>>, %arg2: memref<32x128xbf16, #tpu.memory_space<vmem>>, %arg3: memref<1x128xf32, #tpu.memory_space<vmem>>, %arg4: memref<128x128xbf16, #tpu.memory_space<vmem>>, %arg5: memref<1x128xf32, #tpu.memory_space<vmem>>, %arg6: memref<128x4xbf16, #tpu.memory_space<vmem>>, %arg7: memref<1x4xf32, #tpu.memory_space<vmem>>, %arg8: memref<8x4xf32, #tpu.memory_space<vmem>>) attributes {dimension_semantics = [#tpu.dimension_semantics<parallel>], iteration_bounds = array<i64: 1>, scalar_prefetch = 0 : i64, scratch_operands = 0 : i64, tpu.core_type = #tpu.core_type<tc>, window_params = [{transform_indices = @transform_0, window_bounds = array<i64: 8, 32>}, {pipeline_mode = #tpu.pipeline_mode<synchronous>, transform_indices = @transform_1, window_bounds = array<i64: 32, 128>}, {pipeline_mode = #tpu.pipeline_mode<synchronous>, transform_indices = @transform_2, window_bounds = array<i64: 1, 128>}, {pipeline_mode = #tpu.pipeline_mode<synchronous>, transform_indices = @transform_3, window_bounds = array<i64: 128, 128>}, {pipeline_mode = #tpu.pipeline_mode<synchronous>, transform_indices = @transform_4, window_bounds = array<i64: 1, 128>}, {pipeline_mode = #tpu.pipeline_mode<synchronous>, transform_indices = @transform_5, window_bounds = array<i64: 128, 4>}, {pipeline_mode = #tpu.pipeline_mode<synchronous>, transform_indices = @transform_6, window_bounds = array<i64: 1, 4>}, {transform_indices = @transform_7, window_bounds = array<i64: 8, 4>}]} {
    %c0 = arith.constant 0 : index
    %c0_0 = arith.constant 0 : index
    %0 = vector.load %arg1[%c0, %c0_0] : memref<8x32xf32, #tpu.memory_space<vmem>>, vector<8x32xf32>
    %1 = arith.truncf %0 : vector<8x32xf32> to vector<8x32xbf16>
    %c0_1 = arith.constant 0 : index
    %c0_2 = arith.constant 0 : index
    %2 = vector.load %arg2[%c0_1, %c0_2] : memref<32x128xbf16, #tpu.memory_space<vmem>>, vector<32x128xbf16>
    %cst = arith.constant dense<0.000000e+00> : vector<8x128xf32>
    %3 = tpu.matmul %1, %2, %cst {dimension_numbers = #tpu.dot_dimension_numbers<[1], [0], [0], [1], [0, 0, 1, 1], [], []>} : vector<8x32xbf16>, vector<32x128xbf16>, vector<8x128xf32> -> vector<8x128xf32>
    %c0_3 = arith.constant 0 : index
    %c0_4 = arith.constant 0 : index
    %4 = vector.load %arg3[%c0_3, %c0_4] : memref<1x128xf32, #tpu.memory_space<vmem>>, vector<1x128xf32>
    %5 = vector.broadcast %4 : vector<1x128xf32> to vector<8x128xf32>
    %6 = arith.addf %3, %5 : vector<8x128xf32>
    %cst_5 = arith.constant 0.000000e+00 : f32
    %7 = vector.broadcast %cst_5 : f32 to vector<8x128xf32>
    %8 = arith.maximumf %6, %7 : vector<8x128xf32>
    %9 = arith.truncf %8 : vector<8x128xf32> to vector<8x128xbf16>
    %c0_6 = arith.constant 0 : index
    %c0_7 = arith.constant 0 : index
    %10 = vector.load %arg4[%c0_6, %c0_7] : memref<128x128xbf16, #tpu.memory_space<vmem>>, vector<128x128xbf16>
    %cst_8 = arith.constant dense<0.000000e+00> : vector<8x128xf32>
    %11 = tpu.matmul %9, %10, %cst_8 {dimension_numbers = #tpu.dot_dimension_numbers<[1], [0], [0], [1], [0, 0, 1, 1], [], []>} : vector<8x128xbf16>, vector<128x128xbf16>, vector<8x128xf32> -> vector<8x128xf32>
    %c0_9 = arith.constant 0 : index
    %c0_10 = arith.constant 0 : index
    %12 = vector.load %arg5[%c0_9, %c0_10] : memref<1x128xf32, #tpu.memory_space<vmem>>, vector<1x128xf32>
    %13 = vector.broadcast %12 : vector<1x128xf32> to vector<8x128xf32>
    %14 = arith.addf %11, %13 : vector<8x128xf32>
    %cst_11 = arith.constant 0.000000e+00 : f32
    %15 = vector.broadcast %cst_11 : f32 to vector<8x128xf32>
    %16 = arith.maximumf %14, %15 : vector<8x128xf32>
    %17 = arith.truncf %16 : vector<8x128xf32> to vector<8x128xbf16>
    %c0_12 = arith.constant 0 : index
    %c0_13 = arith.constant 0 : index
    %18 = vector.load %arg6[%c0_12, %c0_13] : memref<128x4xbf16, #tpu.memory_space<vmem>>, vector<128x4xbf16>
    %cst_14 = arith.constant dense<0.000000e+00> : vector<8x4xf32>
    %19 = tpu.matmul %17, %18, %cst_14 {dimension_numbers = #tpu.dot_dimension_numbers<[1], [0], [0], [1], [0, 0, 1, 1], [], []>} : vector<8x128xbf16>, vector<128x4xbf16>, vector<8x4xf32> -> vector<8x4xf32>
    %c0_15 = arith.constant 0 : index
    %c0_16 = arith.constant 0 : index
    %20 = vector.load %arg7[%c0_15, %c0_16] : memref<1x4xf32, #tpu.memory_space<vmem>>, vector<1x4xf32>
    %21 = vector.broadcast %20 : vector<1x4xf32> to vector<8x4xf32>
    %22 = arith.addf %19, %21 : vector<8x4xf32>
    %c0_17 = arith.constant 0 : index
    %c0_18 = arith.constant 0 : index
    %23 = vector.load %arg8[%c0_17, %c0_18] : memref<8x4xf32, #tpu.memory_space<vmem>>, vector<8x4xf32>
    tpu.vector_store %arg8[%c0_17, %c0_18], %22 {strides = array<i32>} : memref<8x4xf32, #tpu.memory_space<vmem>>, vector<8x4xf32>,
    return
  }
  func.func @transform_0(%arg0: i32) -> (i32, i32) {
    %c0_i32 = arith.constant 0 : i32
    %c0_i32_0 = arith.constant 0 : i32
    return %arg0, %c0_i32 : i32, i32
  }
  func.func @transform_1(%arg0: i32) -> (i32, i32) {
    %c0_i32 = arith.constant 0 : i32
    %c0_i32_0 = arith.constant 0 : i32
    %c0_i32_1 = arith.constant 0 : i32
    return %c0_i32, %c0_i32_0 : i32, i32
  }
  func.func @transform_2(%arg0: i32) -> (i32, i32) {
    %c0_i32 = arith.constant 0 : i32
    %c0_i32_0 = arith.constant 0 : i32
    %c0_i32_1 = arith.constant 0 : i32
    return %c0_i32, %c0_i32_0 : i32, i32
  }
  func.func @transform_3(%arg0: i32) -> (i32, i32) {
    %c0_i32 = arith.constant 0 : i32
    %c0_i32_0 = arith.constant 0 : i32
    %c0_i32_1 = arith.constant 0 : i32
    return %c0_i32, %c0_i32_0 : i32, i32
  }
  func.func @transform_4(%arg0: i32) -> (i32, i32) {
    %c0_i32 = arith.constant 0 : i32
    %c0_i32_0 = arith.constant 0 : i32
    %c0_i32_1 = arith.constant 0 : i32
    return %c0_i32, %c0_i32_0 : i32, i32
  }
  func.func @transform_5(%arg0: i32) -> (i32, i32) {
    %c0_i32 = arith.constant 0 : i32
    %c0_i32_0 = arith.constant 0 : i32
    %c0_i32_1 = arith.constant 0 : i32
    return %c0_i32, %c0_i32_0 : i32, i32
  }
  func.func @transform_6(%arg0: i32) -> (i32, i32) {
    %c0_i32 = arith.constant 0 : i32
    %c0_i32_0 = arith.constant 0 : i32
    %c0_i32_1 = arith.constant 0 : i32
    return %c0_i32, %c0_i32_0 : i32, i32
  }
  func.func @transform_7(%arg0: i32) -> (i32, i32) {
    %c0_i32 = arith.constant 0 : i32
    %c0_i32_0 = arith.constant 0 : i32
    return %arg0, %c0_i32 : i32, i32
  }
}

</mosaic_0001>

<llo_original>
// kernel: tpu_custom_call.1
$region0: #{tpu_custom_call.1}
  #allocation0 [shape = 'u32[]', space=smem, size = 0x4, offset = 0x4, fixed_abs, tag = 'smem constant byte address 0x4 - core index']
  #allocation1 [shape = 'u32[144,128]{1,0:T(1,128)}', space=vmem, size = 0x12000, scoped, tag = 'internal scratch']
  %s0 = inlined_call_operand.hbm [shape: f32[8,32], index: 0, kind: input, shape index: {}]
  %s1 = inlined_call_operand.hbm [shape: bf16[32,128], index: 1, kind: input, shape index: {}]
  %s2 = inlined_call_operand.vmem [shape: f32[1,128], index: 2, kind: input, shape index: {}]
  %s3 = inlined_call_operand.vmem [shape: bf16[128,128], index: 3, kind: input, shape index: {}]
  %s4 = inlined_call_operand.vmem [shape: f32[1,128], index: 4, kind: input, shape index: {}]
  %s5 = inlined_call_operand.vmem [shape: bf16[128,4], index: 5, kind: input, shape index: {}]
  %s6 = inlined_call_operand.vmem [shape: f32[1,4], index: 6, kind: input, shape index: {}]
  %s7 = inlined_call_operand.vmem [shape: f32[8,4], index: 7, kind: output, shape index: {}]
  %s8 = sld [smem:[#allocation0]]
  $region46: #{tpu_custom_call.1} parent=0
    _
  %s10 = ssub.s32 1, %s8
  %s11 = scalar_select 0, %s10, %s8
  $region1: #{tpu_custom_call.1} parent=0
    #allocation2 [shape = 'u8[4096]{0}', space=vmem, size = 0x1000, scoped, tag = 'input window, operand 0, single buffered']
    #allocation3 [shape = 's32[1]{0}', space=sflag, size = 0x4, scoped, tag = 'scoped memory for tpu_custom_call.1']
    #allocation4 [shape = 'u8[8192]{0}', space=vmem, size = 0x2000, scoped, tag = 'input window, operand 1, single buffered']
    #allocation5 [shape = 's32[1]{0}', space=sflag, size = 0x4, scoped, tag = 'scoped memory for tpu_custom_call.1']
    %12 = vsyncpa [#allocation3], 0
    %13 = vsyncpa [#allocation5], 0
    // Predicated region
    $region2: #{tpu_custom_call.1} parent=1 // pred_check
      _
    $region3: #{tpu_custom_call.1} parent=1 // pred_check_branch
      %15 = sbr.rel (0) target = $region5
    $region4: #{tpu_custom_call.1} parent=1 // pred_region
      %s17 = ssub.s32 128, 128
      %18 = vsyncadd [#allocation3], %s17
      %s20 = sshll.u32 [#allocation2], 4
      %s21 = int_to_ptr.vmem [resolvable:$true] %s20
      %23 = dma.hbm_to_vmem [thread:$0]  %s0, 128, %s21, [#allocation3]
    $region5: #{tpu_custom_call.1} parent=1 // pred_fallthru
      _
    // Predicated region
    $region6: #{tpu_custom_call.1} parent=1 // pred_check
      _
    $region7: #{tpu_custom_call.1} parent=1 // pred_check_branch
      %25 = sbr.rel (0) target = $region9
    $region8: #{tpu_custom_call.1} parent=1 // pred_region
      %s27 = ssub.s32 256, 256
      %28 = vsyncadd [#allocation5], %s27
      %s29 = sshll.u32 [#allocation4], 4
      %s30 = int_to_ptr.vmem [resolvable:$true] %s29
      %35 = dma.hbm_to_vmem [thread:$0]  %s1, 256, %s30, [#allocation5], 64, 64, 4
    $region9: #{tpu_custom_call.1} parent=1 // pred_fallthru
      _
    // Predicated region
    $region10: #{tpu_custom_call.1} parent=1 // pred_check
      _
    $region11: #{tpu_custom_call.1} parent=1 // pred_check_branch
      %37 = sbr.rel (0) target = $region13
    $region12: #{tpu_custom_call.1} parent=1 // pred_region
      _
    $region13: #{tpu_custom_call.1} parent=1 // pred_fallthru
      _
    // Predicated region
    $region14: #{tpu_custom_call.1} parent=1 // pred_check
      _
    $region15: #{tpu_custom_call.1} parent=1 // pred_check_branch
      %39 = sbr.rel (0) target = $region17
    $region16: #{tpu_custom_call.1} parent=1 // pred_region
      _
    $region17: #{tpu_custom_call.1} parent=1 // pred_fallthru
      _
    // Predicated region
    $region18: #{tpu_custom_call.1} parent=1 // pred_check
      _
    $region19: #{tpu_custom_call.1} parent=1 // pred_check_branch
      %41 = sbr.rel (0) target = $region21
    $region20: #{tpu_custom_call.1} parent=1 // pred_region
      _
    $region21: #{tpu_custom_call.1} parent=1 // pred_fallthru
      _
    // Predicated region
    $region22: #{tpu_custom_call.1} parent=1 // pred_check
      _
    $region23: #{tpu_custom_call.1} parent=1 // pred_check_branch
      %43 = sbr.rel (0) target = $region25
    $region24: #{tpu_custom_call.1} parent=1 // pred_region
      _
    $region25: #{tpu_custom_call.1} parent=1 // pred_fallthru
      _
    // Predicated region
    $region26: #{tpu_custom_call.1} parent=1 // pred_check
      _
    $region27: #{tpu_custom_call.1} parent=1 // pred_check_branch
      %45 = sbr.rel (0) target = $region29
    $region28: #{tpu_custom_call.1} parent=1 // pred_region
      _
    $region29: #{tpu_custom_call.1} parent=1 // pred_fallthru
      _
    // Predicated region
    $region30: #{tpu_custom_call.1} parent=1 // pred_check
      _
    $region31: #{tpu_custom_call.1} parent=1 // pred_check_branch
      %47 = sbr.rel (0) target = $region33
    $region32: #{tpu_custom_call.1} parent=1 // pred_region
      %48 = dma.done [#allocation3], 128
    $region33: #{tpu_custom_call.1} parent=1 // pred_fallthru
      _
    // Predicated region
    $region34: #{tpu_custom_call.1} parent=1 // pred_check
      _
    $region35: #{tpu_custom_call.1} parent=1 // pred_check_branch
      %50 = sbr.rel (0) target = $region37
    $region36: #{tpu_custom_call.1} parent=1 // pred_region
      %51 = dma.done [#allocation5], 256
    $region37: #{tpu_custom_call.1} parent=1 // pred_fallthru
      _
    %v53 = vld [vmem:[#allocation2] sm:$0xff]
    %v54 = vpack.c.bf16 %v53, %v53
    %v55 = vld [vmem:[#allocation4] sm:$0xf]
    %v56 = vld [vmem:[#allocation4 + $0x4] sm:$0xf]
    %v57 = vld [vmem:[#allocation4 + $0x8] sm:$0xf]
    %v58 = vld [vmem:[#allocation4 + $0xc] sm:$0xf]
    %v59 = vld [vmem:[%s2] sm:$0x1]
    %v61 = vlaneseq
    %v62 = vshrl.u32 %v61, 7
    %v63 = vsub.s32 0, %v62
    %v64 = vrot.slane %v59, %v63
    %v70 = vunpack.c.l.b16 %v55
    %v71 = vunpack.c.l.b16 %v56
    %v72 = vunpack.c.l.b16 %v57
    %v73 = vunpack.c.l.b16 %v58
    %v74 = vpack.c.b16 %v71, %v70
    %v75 = vpack.c.b16 %v73, %v72
    %vm78 = vcmask 261120
    %v80 = vsel %vm78, %v54, 0
    %82 = vmatprep.subr.bf16.mxu0 0
    %83 = vmatpush1.bf16.msra.mxu0 0
    %84 = vmatprep.subr.bf16.mxu0 0
    %85 = vmatpush1.bf16.msra.mxu0 0
    %86 = vmatprep.subr.bf16.mxu0 0
    %87 = vmatpush1.bf16.msra.mxu0 0
    %88 = vmatprep.subr.bf16.mxu0 0
    %89 = vmatpush1.bf16.msra.mxu0 0
    %90 = vmatprep.subr.bf16.mxu0 0
    %91 = vmatpush1.bf16.msra.mxu0 0
    %92 = vmatprep.subr.bf16.mxu0 0
    %93 = vmatpush1.bf16.msra.mxu0 0
    %94 = vmatprep.subr.bf16.mxu0 0
    %95 = vmatpush1.bf16.msra.mxu0 %v75
    %96 = vmatprep.subr.bf16.mxu0 0
    %97 = vmatpush1.bf16.msra.mxu0 %v74
    %98 = vmatprep.subr.bf16.mxu0 0
    %99 = vmatpush2.bf16.msra.mxu0 0
    %100 = vmatprep.subr.bf16.mxu0 0
    %101 = vmatpush2.bf16.msra.mxu0 0
    %102 = vmatprep.subr.bf16.mxu0 0
    %103 = vmatpush2.bf16.msra.mxu0 0
    %104 = vmatprep.subr.bf16.mxu0 0
    %105 = vmatpush2.bf16.msra.mxu0 0
    %106 = vmatprep.subr.bf16.mxu0 0
    %107 = vmatpush2.bf16.msra.mxu0 0
    %108 = vmatprep.subr.bf16.mxu0 0
    %109 = vmatpush2.bf16.msra.mxu0 0
    %110 = vmatprep.subr.bf16.mxu0 0
    %111 = vmatpush2.bf16.msra.mxu0 0
    %112 = vmatprep.subr.bf16.mxu0 0
    %113 = vmatpush2.bf16.msra.mxu0 0
    %114 = vmatprep.mubr.bf16.mxu0 0
    %115 = vmatmul.mubr.bf16.gmra.mxu0 %v80
    %v116 = vpop.f32.mrf.mxu0
    %v117 = vadd.f32 %v64, %v116
    %v118 = vpop.f32.mrf.mxu0
    %v119 = vpop.f32.mrf.mxu0
    %v120 = vpop.f32.mrf.mxu0
    %121 = vdwg.mxu0
    %v122 = vmax.f32 %v117, 0.0
    %v123 = vpack.c.bf16 %v122, %v122
    %v124 = vld [vmem:[%s3] sm:$0xf]
    %v125 = vld [vmem:[%s3 + $0x4] sm:$0xf]
    %v126 = vld [vmem:[%s3 + $0x8] sm:$0xf]
    %v127 = vld [vmem:[%s3 + $0xc] sm:$0xf]
    %v128 = vld [vmem:[%s3 + $0x10] sm:$0xf]
    %v129 = vld [vmem:[%s3 + $0x14] sm:$0xf]
    %v130 = vld [vmem:[%s3 + $0x18] sm:$0xf]
    %v131 = vld [vmem:[%s3 + $0x1c] sm:$0xf]
    %v132 = vld [vmem:[%s3 + $0x20] sm:$0xf]
    %v133 = vld [vmem:[%s3 + $0x24] sm:$0xf]
    %v134 = vld [vmem:[%s3 + $0x28] sm:$0xf]
    %v135 = vld [vmem:[%s3 + $0x2c] sm:$0xf]
    %v136 = vld [vmem:[%s3 + $0x30] sm:$0xf]
    %v137 = vld [vmem:[%s3 + $0x34] sm:$0xf]
    %v138 = vld [vmem:[%s3 + $0x38] sm:$0xf]
    %v139 = vld [vmem:[%s3 + $0x3c] sm:$0xf]
    %v140 = vld [vmem:[%s4] sm:$0x1]
    %v142 = vlaneseq
    %v143 = vshrl.u32 %v142, 7
    %v144 = vsub.s32 0, %v143
    %v145 = vrot.slane %v140, %v144
    %v163 = vunpack.c.l.b16 %v124
    %v164 = vunpack.c.l.b16 %v125
    %v165 = vunpack.c.l.b16 %v126
    %v166 = vunpack.c.l.b16 %v127
    %v167 = vunpack.c.l.b16 %v128
    %v168 = vunpack.c.l.b16 %v129
    %v169 = vunpack.c.l.b16 %v130
    %v170 = vunpack.c.l.b16 %v131
    %v171 = vunpack.c.l.b16 %v132
    %v172 = vunpack.c.l.b16 %v133
    %v173 = vunpack.c.l.b16 %v134
    %v174 = vunpack.c.l.b16 %v135
    %v175 = vunpack.c.l.b16 %v136
    %v176 = vunpack.c.l.b16 %v137
    %v177 = vunpack.c.l.b16 %v138
    %v178 = vunpack.c.l.b16 %v139
    %v179 = vpack.c.b16 %v164, %v163
    %v180 = vpack.c.b16 %v166, %v165
    %v181 = vpack.c.b16 %v168, %v167
    %v182 = vpack.c.b16 %v170, %v169
    %v183 = vpack.c.b16 %v172, %v171
    %v184 = vpack.c.b16 %v174, %v173
    %v185 = vpack.c.b16 %v176, %v175
    %v186 = vpack.c.b16 %v178, %v177
    %195 = vmatprep.subr.bf16.mxu0 0
    %196 = vmatpush1.bf16.msra.mxu0 %v186
    %197 = vmatprep.subr.bf16.mxu0 0
    %198 = vmatpush1.bf16.msra.mxu0 %v185
    %199 = vmatprep.subr.bf16.mxu0 0
    %200 = vmatpush1.bf16.msra.mxu0 %v184
    %201 = vmatprep.subr.bf16.mxu0 0
    %202 = vmatpush1.bf16.msra.mxu0 %v183
    %203 = vmatprep.subr.bf16.mxu0 0
    %204 = vmatpush1.bf16.msra.mxu0 %v182
    %205 = vmatprep.subr.bf16.mxu0 0
    %206 = vmatpush1.bf16.msra.mxu0 %v181
    %207 = vmatprep.subr.bf16.mxu0 0
    %208 = vmatpush1.bf16.msra.mxu0 %v180
    %209 = vmatprep.subr.bf16.mxu0 0
    %210 = vmatpush1.bf16.msra.mxu0 %v179
    %211 = vmatprep.subr.bf16.mxu0 0
    %212 = vmatpush2.bf16.msra.mxu0 0
    %213 = vmatprep.subr.bf16.mxu0 0
    %214 = vmatpush2.bf16.msra.mxu0 0
    %215 = vmatprep.subr.bf16.mxu0 0
    %216 = vmatpush2.bf16.msra.mxu0 0
    %217 = vmatprep.subr.bf16.mxu0 0
    %218 = vmatpush2.bf16.msra.mxu0 0
    %219 = vmatprep.subr.bf16.mxu0 0
    %220 = vmatpush2.bf16.msra.mxu0 0
    %221 = vmatprep.subr.bf16.mxu0 0
    %222 = vmatpush2.bf16.msra.mxu0 0
    %223 = vmatprep.subr.bf16.mxu0 0
    %224 = vmatpush2.bf16.msra.mxu0 0
    %225 = vmatprep.subr.bf16.mxu0 0
    %226 = vmatpush2.bf16.msra.mxu0 0
    %227 = vmatprep.mubr.bf16.mxu0 0
    %228 = vmatmul.mubr.bf16.gmra.mxu0 %v123
    %v229 = vpop.f32.mrf.mxu0
    %v230 = vadd.f32 %v145, %v229
    %v231 = vpop.f32.mrf.mxu0
    %v232 = vpop.f32.mrf.mxu0
    %v233 = vpop.f32.mrf.mxu0
    %234 = vdwg.mxu0
    %v235 = vmax.f32 %v230, 0.0
    %v236 = vpack.c.bf16 %v235, %v235
    %v237 = vld [vmem:[%s5] sm:$0xf]
    %v238 = vld [vmem:[%s5 + $0x4] sm:$0xf]
    %v239 = vld [vmem:[%s5 + $0x8] sm:$0xf]
    %v240 = vld [vmem:[%s5 + $0xc] sm:$0xf]
    %v241 = vld [vmem:[%s5 + $0x10] sm:$0xf]
    %v242 = vld [vmem:[%s5 + $0x14] sm:$0xf]
    %v243 = vld [vmem:[%s5 + $0x18] sm:$0xf]
    %v244 = vld [vmem:[%s5 + $0x1c] sm:$0xf]
    %v245 = vld [vmem:[%s5 + $0x20] sm:$0xf]
    %v246 = vld [vmem:[%s5 + $0x24] sm:$0xf]
    %v247 = vld [vmem:[%s5 + $0x28] sm:$0xf]
    %v248 = vld [vmem:[%s5 + $0x2c] sm:$0xf]
    %v249 = vld [vmem:[%s5 + $0x30] sm:$0xf]
    %v250 = vld [vmem:[%s5 + $0x34] sm:$0xf]
    %v251 = vld [vmem:[%s5 + $0x38] sm:$0xf]
    %v252 = vld [vmem:[%s5 + $0x3c] sm:$0xf]
    %v253 = vld [vmem:[%s6] sm:$0x1]
    %v255 = vlaneseq
    %v256 = vshrl.u32 %v255, 7
    %v257 = vsub.s32 0, %v256
    %v258 = vrot.slane %v253, %v257
    %v276 = vunpack.c.l.b16 %v237
    %v277 = vunpack.c.l.b16 %v238
    %v278 = vunpack.c.l.b16 %v239
    %v279 = vunpack.c.l.b16 %v240
    %v280 = vunpack.c.l.b16 %v241
    %v281 = vunpack.c.l.b16 %v242
    %v282 = vunpack.c.l.b16 %v243
    %v283 = vunpack.c.l.b16 %v244
    %v284 = vunpack.c.l.b16 %v245
    %v285 = vunpack.c.l.b16 %v246
    %v286 = vunpack.c.l.b16 %v247
    %v287 = vunpack.c.l.b16 %v248
    %v288 = vunpack.c.l.b16 %v249
    %v289 = vunpack.c.l.b16 %v250
    %v290 = vunpack.c.l.b16 %v251
    %v291 = vunpack.c.l.b16 %v252
    %v292 = vpack.c.b16 %v277, %v276
    %v293 = vpack.c.b16 %v279, %v278
    %v294 = vpack.c.b16 %v281, %v280
    %v295 = vpack.c.b16 %v283, %v282
    %v296 = vpack.c.b16 %v285, %v284
    %v297 = vpack.c.b16 %v287, %v286
    %v298 = vpack.c.b16 %v289, %v288
    %v299 = vpack.c.b16 %v291, %v290
    %308 = vmatprep.subr.bf16.mxu0 0
    %309 = vmatpush1.bf16.msra.mxu0 %v299
    %310 = vmatprep.subr.bf16.mxu0 0
    %311 = vmatpush1.bf16.msra.mxu0 %v298
    %312 = vmatprep.subr.bf16.mxu0 0
    %313 = vmatpush1.bf16.msra.mxu0 %v297
    %314 = vmatprep.subr.bf16.mxu0 0
    %315 = vmatpush1.bf16.msra.mxu0 %v296
    %316 = vmatprep.subr.bf16.mxu0 0
    %317 = vmatpush1.bf16.msra.mxu0 %v295
    %318 = vmatprep.subr.bf16.mxu0 0
    %319 = vmatpush1.bf16.msra.mxu0 %v294
    %320 = vmatprep.subr.bf16.mxu0 0
    %321 = vmatpush1.bf16.msra.mxu0 %v293
    %322 = vmatprep.subr.bf16.mxu0 0
    %323 = vmatpush1.bf16.msra.mxu0 %v292
    %324 = vmatprep.subr.bf16.mxu0 0
    %325 = vmatpush2.bf16.msra.mxu0 0
    %326 = vmatprep.subr.bf16.mxu0 0
    %327 = vmatpush2.bf16.msra.mxu0 0
    %328 = vmatprep.subr.bf16.mxu0 0
    %329 = vmatpush2.bf16.msra.mxu0 0
    %330 = vmatprep.subr.bf16.mxu0 0
    %331 = vmatpush2.bf16.msra.mxu0 0
    %332 = vmatprep.subr.bf16.mxu0 0
    %333 = vmatpush2.bf16.msra.mxu0 0
    %334 = vmatprep.subr.bf16.mxu0 0
    %335 = vmatpush2.bf16.msra.mxu0 0
    %336 = vmatprep.subr.bf16.mxu0 0
    %337 = vmatpush2.bf16.msra.mxu0 0
    %338 = vmatprep.subr.bf16.mxu0 0
    %339 = vmatpush2.bf16.msra.mxu0 0
    %340 = vmatprep.mubr.bf16.mxu0 0
    %341 = vmatmul.mubr.bf16.gmra.mxu0 %v236
    %v342 = vpop.f32.mrf.mxu0
    %v343 = vadd.f32 %v258, %v342
    %v344 = vpop.f32.mrf.mxu0
    %v345 = vpop.f32.mrf.mxu0
    %v346 = vpop.f32.mrf.mxu0
    %347 = vdwg.mxu0
    %vm348 = vcmask 31744
    %349 = vst.msk [vmem:[%s7] sm:$0xff] %vm348, %v343
    // Predicated region
    $region38: #{tpu_custom_call.1} parent=1 // pred_check
      _
    $region39: #{tpu_custom_call.1} parent=1 // pred_check_branch
      %351 = sbr.rel (0) target = $region41
    $region40: #{tpu_custom_call.1} parent=1 // pred_region
      _
    $region41: #{tpu_custom_call.1} parent=1 // pred_fallthru
      _
    // Predicated region
    $region42: #{tpu_custom_call.1} parent=1 // pred_check
      _
    $region43: #{tpu_custom_call.1} parent=1 // pred_check_branch
      %353 = sbr.rel (0) target = $region45
    $region44: #{tpu_custom_call.1} parent=1 // pred_region
      _
    $region45: #{tpu_custom_call.1} parent=1 // pred_fallthru
      _
    %354 = vsyncpa [#allocation3], 1
    %355 = vsyncpa [#allocation5], 1

</llo_original>
